<compile_context>
chip_gen: v6e
topology: v6e:2x2x1
jax: 0.10.0
libtpu: 0.0.40
codegen_flags: <defaults>
</compile_context>

<pallas_src>
import functools

import jax
import jax.numpy as jnp
from jax import lax
from jax.experimental import pallas as pl
from jax.experimental.pallas import tpu as pltpu

_LANE = 128


# --------------------------------------------------------------------------- #
# VMEM / tile planning (generation-aware)
# --------------------------------------------------------------------------- #
def _vmem_capacity_bytes():
    """Physical per-core VMEM; conservative v7x default if the query fails."""
    try:
        cap = int(pltpu.get_tpu_info().vmem_capacity_bytes)
        if cap > 0:
            return cap
    except Exception:
        pass
    return 64 << 20  # v7x per-TensorCore VMEM


def _choose_tk(k, m, itemsize, with_target):
    """Largest lane-aligned K tile whose double-buffered (M, TK) block fits."""
    if k <= _LANE:
        return int(k)  # single full-width block (last dim == full array dim)
    cap = _vmem_capacity_bytes()
    # f32 accumulator (+ single-buffered target copy for the loss kernel)
    resident = m * m * 4 * (2 if with_target else 1)
    # Per-block budget: 24 MiB on 128-MiB-VMEM chips (v5e/v6e), 12 MiB on v7x.
    per_block_cap = (24 << 20) if cap >= (96 << 20) else (12 << 20)
    budget = (cap - (4 << 20) - resident) // 2          # double-buffered F block
    budget = min(max(budget, _LANE * m * itemsize), per_block_cap)
    tk = max(_LANE, budget // max(m * itemsize, 1) // _LANE * _LANE)
    tk = min(tk, pl.cdiv(k, _LANE) * _LANE)             # never wider than padded K
    return int(tk)


def _vmem_limit_bytes(m, tk, itemsize, with_target):
    """Request enough VMEM for 2x F block + accumulator (+ target), clamped
    below physical capacity (never ask for more than the chip has)."""
    cap = _vmem_capacity_bytes()
    resident = m * m * 4 * (2 if with_target else 1)
    need = 2 * m * tk * itemsize + resident + (4 << 20)
    return int(min(max(need, 32 << 20), cap - (1 << 20)))


def _prep_features(x, compute_dtype):
    """Flatten NCHW -> (N*C, H*W); optional bf16 cast.  No padding copy."""
    a, b, c, d = x.shape
    f = x.reshape(a * b, c * d)
    if compute_dtype is not None and f.dtype != jnp.dtype(compute_dtype):
        f = f.astype(compute_dtype)
    return f, a * b, c * d


# --------------------------------------------------------------------------- #
# Kernels
# --------------------------------------------------------------------------- #
def _gram_accumulate(f_ref, acc_ref, *, k_total, tk):
    """One K-step of G += F_k @ F_k^T (trans-B dot_general, f32 accumulate)."""
    kk = pl.program_id(0)
    f = f_ref[...]  # native dtype (bf16 fast path); MXU accumulates in f32

    if k_total % tk:
        # Trailing partial K block: lanes beyond k_total hold undefined data
        # (no host-side jnp.pad anymore) -> zero them before the dot.
        col = lax.broadcasted_iota(jnp.int32, f.shape, 1) + kk * tk
        f = jnp.where(col < k_total, f, jnp.zeros_like(f))

    contrib = lax.dot_general(
        f, f,
        dimension_numbers=(((1,), (1,)), ((), ())),
        preferred_element_type=jnp.float32,
    )

    @pl.when(kk == 0)
    def _():
        acc_ref[...] = contrib          # direct write: no zero-fill + RMW pass

    @pl.when(kk != 0)
    def _():
        acc_ref[...] = acc_ref[...] + contrib


def _gram_kernel(f_ref, gram_ref, acc_ref, *, inv_norm, k_total, tk):
    """Standalone gram matrix (used once to build the detached target)."""
    _gram_accumulate(f_ref, acc_ref, k_total=k_total, tk=tk)

    @pl.when(pl.program_id(0) == pl.num_programs(0) - 1)
    def _():
        gram_ref[...] = acc_ref[...] * inv_norm


def _style_loss_kernel(f_ref, tgt_hbm_ref, loss_ref, acc_ref, tgt_vmem_ref,
                       tgt_sem, *, inv_norm, inv_nelem, k_total, tk):
    """Gram of the input (VMEM-only) + MSE vs. target gram -> scalar loss.

    The target gram is single-buffered: one DMA HBM->VMEM started at k==0,
    waited only in the epilogue (so it overlaps with all matmul work and does
    not occupy a double-buffered pipeline slot)."""
    kk = pl.program_id(0)

    @pl.when(kk == 0)
    def _():
        pltpu.make_async_copy(tgt_hbm_ref, tgt_vmem_ref, tgt_sem).start()

    _gram_accumulate(f_ref, acc_ref, k_total=k_total, tk=tk)

    @pl.when(kk == pl.num_programs(0) - 1)
    def _():
        pltpu.make_async_copy(tgt_hbm_ref, tgt_vmem_ref, tgt_sem).wait()
        g = acc_ref[...] * inv_norm     # single full-tile scale, epilogue only
        diff = g - tgt_vmem_ref[...]
        loss_ref[0, 0] = jnp.sum(diff * diff) * inv_nelem


# --------------------------------------------------------------------------- #
# Wrappers
# --------------------------------------------------------------------------- #
def gram_matrix(x, tk=None, compute_dtype=jnp.bfloat16):
    """x: (a, b, c, d) NCHW -> (a*b, a*b) float32 gram, divided by a*b*c*d."""
    a, b, c, d = x.shape
    norm = float(a * b * c * d)
    f, m, k = _prep_features(x, compute_dtype)
    if tk is None:
        tk = _choose_tk(k, m, f.dtype.itemsize, with_target=False)
    num_k = pl.cdiv(k, tk)

    return pl.pallas_call(
        functools.partial(_gram_kernel, inv_norm=1.0 / norm, k_total=k, tk=tk),
        out_shape=jax.ShapeDtypeStruct((m, m), jnp.float32),
        grid_spec=pltpu.PrefetchScalarGridSpec(
            num_scalar_prefetch=0,
            grid=(num_k,),
            in_specs=[pl.BlockSpec((m, tk), lambda kk: (0, kk))],
            out_specs=pl.BlockSpec((m, m), lambda kk: (0, 0)),
            scratch_shapes=[pltpu.VMEM((m, m), jnp.float32)],
        ),
        compiler_params=pltpu.CompilerParams(
            dimension_semantics=("arbitrary",),
            vmem_limit_bytes=_vmem_limit_bytes(m, tk, f.dtype.itemsize,
                                               with_target=False),
        ),
        cost_estimate=pl.CostEstimate(
            flops=2 * m * m * k,
            transcendentals=0,
            bytes_accessed=f.size * f.dtype.itemsize + m * m * 4,
        ),
    )(f)


class StyleLoss:
    """JAX/Pallas port of the PyTorch StyleLoss module (forward pass)."""

    def __init__(self, target_feature, tk=None, compute_dtype=jnp.bfloat16):
        self.tk = tk
        self.compute_dtype = compute_dtype
        # target gram, detached (a concrete f32 array here)
        self.target = jax.block_until_ready(
            gram_matrix(target_feature, tk=tk, compute_dtype=compute_dtype))
        self.loss = None

    def __call__(self, x):
        a, b, c, d = x.shape
        norm = float(a * b * c * d)
        f, m, k = _prep_features(x, self.compute_dtype)
        tk = self.tk
        if tk is None:
            tk = _choose_tk(k, m, f.dtype.itemsize, with_target=True)
        num_k = pl.cdiv(k, tk)

        loss = pl.pallas_call(
            functools.partial(
                _style_loss_kernel,
                inv_norm=1.0 / norm,
                inv_nelem=1.0 / float(m * m),
                k_total=k,
                tk=tk,
            ),
            out_shape=jax.ShapeDtypeStruct((1, 1), jnp.float32),
            grid_spec=pltpu.PrefetchScalarGridSpec(
                num_scalar_prefetch=0,
                grid=(num_k,),
                in_specs=[
                    pl.BlockSpec((m, tk), lambda kk: (0, kk)),   # F K-tiles (pipelined)
                    pl.BlockSpec(memory_space=pl.ANY),           # target gram stays in HBM
                ],
                out_specs=pl.BlockSpec(memory_space=pltpu.MemorySpace.SMEM),
                scratch_shapes=[
                    pltpu.VMEM((m, m), jnp.float32),             # gram accumulator
                    pltpu.VMEM((m, m), jnp.float32),             # single-buffered target copy
                    pltpu.SemaphoreType.DMA(()),
                ],
            ),
            compiler_params=pltpu.CompilerParams(
                dimension_semantics=("arbitrary",),
                vmem_limit_bytes=_vmem_limit_bytes(m, tk, f.dtype.itemsize,
                                                   with_target=True),
            ),
            cost_estimate=pl.CostEstimate(
                flops=2 * m * m * k,
                transcendentals=0,
                bytes_accessed=f.size * f.dtype.itemsize + m * m * 4 + 4,
            ),
        )(f, self.target)

        self.loss = loss[0, 0]
        # forward is a transparent layer: returns its input unchanged
        return x


# --------------------------------------------------------------------------- #
# Self-test
# --------------------------------------------------------------------------- #
if __name__ == "__main__":
    key = jax.random.PRNGKey(0)
    k_tgt1, k_in1, k_tgt2, k_in2 = jax.random.split(key, 4)

    def ref_gram(v, cast=None):
        a, b, c, d = v.shape
        fm = v.reshape(a * b, c * d)
        if cast is not None:
            fm = fm.astype(cast)
        fm = fm.astype(jnp.float32)
        return (fm @ fm.T) / (a * b * c * d)

    def ref_loss(x, t, cast=None):
        return jnp.mean((ref_gram(x, cast) - ref_gram(t, cast)) ** 2)

    # Case 1: f32 features, K = 16*18 = 288 not a multiple of TK=128
    # -> exercises multi-step accumulation AND the in-kernel partial-block
    #    masking that replaced the host-side jnp.pad.
    tf1 = jax.random.normal(k_tgt1, (2, 4, 16, 18), dtype=jnp.float32)
    x1 = jax.random.normal(k_in1, (2, 4, 16, 18), dtype=jnp.float32)
    mod1 = StyleLoss(tf1, tk=128, compute_dtype=jnp.float32)
    out1 = mod1(x1)
    jax.block_until_ready(out1)
    loss1 = jax.block_until_ready(mod1.loss)
    ref1 = ref_loss(x1, tf1)
    assert jnp.allclose(out1, x1), "forward must return its input unchanged"
    assert jnp.allclose(loss1, ref1, rtol=1e-5, atol=1e-6), (loss1, ref1)

    # Case 2: default bf16 feature fast path, auto TK (single K step here).
    # Reference applies the same bf16 feature cast (f32 accumulation in both),
    # so tolerances stay tight.
    tf2 = jax.random.normal(k_tgt2, (2, 4, 16, 16), dtype=jnp.float32)
    x2 = jax.random.normal(k_in2, (2, 4, 16, 16), dtype=jnp.float32)
    mod2 = StyleLoss(tf2)
    out2 = mod2(x2)
    jax.block_until_ready(out2)
    loss2 = jax.block_until_ready(mod2.loss)
    ref2 = ref_loss(x2, tf2, cast=jnp.bfloat16)
    assert jnp.allclose(out2, x2), "forward must return its input unchanged"
    assert jnp.allclose(loss2, ref2, rtol=1e-5, atol=1e-6), (loss2, ref2)

    print("KERNEL_OK")
</pallas_src>

<mosaic_0001>
module attributes {stable_mosaic.version = 11 : i64} {
  func.func @_gram_kernel(%arg0: i32, %arg1: memref<8x128xf32, #tpu.memory_space<vmem>>, %arg2: memref<8x8xf32, #tpu.memory_space<vmem>>, %arg3: memref<8x8xf32, #tpu.memory_space<vmem>>) attributes {dimension_semantics = [#tpu.dimension_semantics<arbitrary>], iteration_bounds = array<i64: 3>, scalar_prefetch = 0 : i64, scratch_operands = 1 : i64, tpu.core_type = #tpu.core_type<tc>, window_params = [{transform_indices = @transform_0, window_bounds = array<i64: 8, 128>}, {pipeline_mode = #tpu.pipeline_mode<synchronous>, transform_indices = @transform_1, window_bounds = array<i64: 8, 8>}]} {
    %c0 = arith.constant 0 : index
    %c0_0 = arith.constant 0 : index
    %0 = vector.load %arg1[%c0, %c0_0] : memref<8x128xf32, #tpu.memory_space<vmem>>, vector<8x128xf32>
    %1 = tpu.iota {dimensions = array<i32: 1>} : vector<8x128xi32>
    %c128_i32 = arith.constant 128 : i32
    %2 = arith.muli %arg0, %c128_i32 : i32
    %3 = vector.broadcast %2 : i32 to vector<8x128xi32>
    %4 = arith.addi %1, %3 : vector<8x128xi32>
    %c288_i32 = arith.constant 288 : i32
    %5 = vector.broadcast %c288_i32 : i32 to vector<8x128xi32>
    %6 = arith.cmpi slt, %4, %5 : vector<8x128xi32>
    %cst = arith.constant 0.000000e+00 : f32
    %7 = vector.broadcast %cst : f32 to vector<8x128xf32>
    %8 = arith.select %6, %0, %7 : vector<8x128xi1>, vector<8x128xf32>
    %cst_1 = arith.constant dense<0.000000e+00> : vector<8x8xf32>
    %9 = tpu.matmul %8, %8, %cst_1 {dimension_numbers = #tpu.dot_dimension_numbers<[1], [1], [0], [0], [0, 0, 1, 0], [], []>} : vector<8x128xf32>, vector<8x128xf32>, vector<8x8xf32> -> vector<8x8xf32>
    %c0_i32 = arith.constant 0 : i32
    %10 = arith.cmpi eq, %arg0, %c0_i32 : i32
    %11 = arith.extui %10 : i1 to i32
    %c0_i32_2 = arith.constant 0 : i32
    %12 = arith.cmpi ne, %11, %c0_i32_2 : i32
    scf.if %12 {
      %c0_6 = arith.constant 0 : index
      %c0_7 = arith.constant 0 : index
      %19 = vector.load %arg3[%c0_6, %c0_7] : memref<8x8xf32, #tpu.memory_space<vmem>>, vector<8x8xf32>
      tpu.vector_store %arg3[%c0_6, %c0_7], %9 {strides = array<i32>} : memref<8x8xf32, #tpu.memory_space<vmem>>, vector<8x8xf32>,
    } else {
    }
    %c0_i32_3 = arith.constant 0 : i32
    %13 = arith.cmpi ne, %arg0, %c0_i32_3 : i32
    %14 = arith.extui %13 : i1 to i32
    %c0_i32_4 = arith.constant 0 : i32
    %15 = arith.cmpi ne, %14, %c0_i32_4 : i32
    scf.if %15 {
      %c0_6 = arith.constant 0 : index
      %c0_7 = arith.constant 0 : index
      %19 = vector.load %arg3[%c0_6, %c0_7] : memref<8x8xf32, #tpu.memory_space<vmem>>, vector<8x8xf32>
      %20 = arith.addf %19, %9 : vector<8x8xf32>
      %c0_8 = arith.constant 0 : index
      %c0_9 = arith.constant 0 : index
      %21 = vector.load %arg3[%c0_8, %c0_9] : memref<8x8xf32, #tpu.memory_space<vmem>>, vector<8x8xf32>
      tpu.vector_store %arg3[%c0_8, %c0_9], %20 {strides = array<i32>} : memref<8x8xf32, #tpu.memory_space<vmem>>, vector<8x8xf32>,
    } else {
    }
    %c2_i32 = arith.constant 2 : i32
    %16 = arith.cmpi eq, %arg0, %c2_i32 : i32
    %17 = arith.extui %16 : i1 to i32
    %c0_i32_5 = arith.constant 0 : i32
    %18 = arith.cmpi ne, %17, %c0_i32_5 : i32
    scf.if %18 {
      %c0_6 = arith.constant 0 : index
      %c0_7 = arith.constant 0 : index
      %19 = vector.load %arg3[%c0_6, %c0_7] : memref<8x8xf32, #tpu.memory_space<vmem>>, vector<8x8xf32>
      %cst_8 = arith.constant 4.34027781E-4 : f32
      %20 = vector.broadcast %cst_8 : f32 to vector<8x8xf32>
      %21 = arith.mulf %19, %20 : vector<8x8xf32>
      %c0_9 = arith.constant 0 : index
      %c0_10 = arith.constant 0 : index
      %22 = vector.load %arg2[%c0_9, %c0_10] : memref<8x8xf32, #tpu.memory_space<vmem>>, vector<8x8xf32>
      tpu.vector_store %arg2[%c0_9, %c0_10], %21 {strides = array<i32>} : memref<8x8xf32, #tpu.memory_space<vmem>>, vector<8x8xf32>,
    } else {
    }
    return
  }
  func.func @transform_0(%arg0: i32) -> (i32, i32) {
    %c0_i32 = arith.constant 0 : i32
    %c0_i32_0 = arith.constant 0 : i32
    return %c0_i32, %arg0 : i32, i32
  }
  func.func @transform_1(%arg0: i32) -> (i32, i32) {
    %c0_i32 = arith.constant 0 : i32
    %c0_i32_0 = arith.constant 0 : i32
    %c0_i32_1 = arith.constant 0 : i32
    return %c0_i32, %c0_i32_0 : i32, i32
  }
}

</mosaic_0001>

<llo_original>
// kernel: tpu_custom_call.1
$region0: #{tpu_custom_call.1}
  #allocation0 [shape = 'u32[]', space=smem, size = 0x4, offset = 0x4, fixed_abs, tag = 'smem constant byte address 0x4 - core index']
  #allocation1 [shape = 'u32[144,128]{1,0:T(1,128)}', space=vmem, size = 0x12000, scoped, tag = 'internal scratch']
  #allocation2 [shape = 'f32[8,8]{1,0:T(8,128)}', space=vmem, size = 0x1000, scoped, tag = 'scratch operand']
  %s0 = inlined_call_operand.hbm [shape: f32[8,288], index: 0, kind: input, shape index: {}]
  %s1 = inlined_call_operand.hbm [shape: f32[8,8], index: 1, kind: output, shape index: {}]
  %s2 = sld [smem:[#allocation0]]
  $region53: #{tpu_custom_call.1} parent=0
    _
  %s4 = ssub.s32 1, %s2
  %s5 = scalar_select 0, %s4, %s2
  $region1: #{tpu_custom_call.1} parent=0
    #allocation3 [shape = 'u8[8192]{0}', space=vmem, size = 0x2000, scoped, tag = 'input window, operand 0']
    #allocation4 [shape = 's32[2]{0}', space=sflag, size = 0x8, scoped, tag = 'scoped memory for tpu_custom_call.1']
    #allocation5 [shape = 's32[2]{0}', space=sflag, size = 0x8, scoped, tag = 'scoped memory for tpu_custom_call.1']
    #allocation6 [shape = 'u8[4096]{0}', space=vmem, size = 0x1000, scoped, tag = 'output window, operand 0, single buffered']
    %6 = vsyncpa [#allocation4], 0
    %s7 = scalar_lea.sflag [#allocation4], 1
    %8 = vsyncpa %s7, 0
    %9 = vsyncpa [#allocation5], 0
    loop: start=0, step=1, limit=5
    $region2: #{tpu_custom_call.1} parent=1 // loop_pre_header
      _
    $region3: #{tpu_custom_call.1} parent=1 // loop_header
      %s11 = sphi 0, %s15
      %p12 = scmp.ge.s32.totalorder %s11, 5
      %s21 = sphi 0, %s23
      %s24 = sphi 0, %s21
      %s25 = sphi 0, %s24
      %s41 = sphi 0, %s25
      %s45 = sphi 0, %s45
      %s47 = sphi 0, %s45
      %s48 = sphi 0, %s47
      %s62 = sphi 0, %s48
    $region4: #{tpu_custom_call.1} parent=1 // loop_header_branch
      %14 = sbr.rel (%p12) target = $region8
    $region5: #{tpu_custom_call.1} parent=1 // loop_body
      %s16 = ssub.s32 %s11, 1
      %s17 = ssub.s32 %s11, 2
      %s18 = sadd.s32 %s11, 1
      %s19 = ssub.s32 %s11, %s18
      %p20 = scmp.eq.s32.totalorder %s19, 0
      %s22 = sadd.s32 %s21, 1
      %s23 = scalar_select %p20, %s21, %s22
      %p26 = pneg %p20
      %p27 = scmp.eq.s32.totalorder %s11, 2
      %p28 = por %p26, %p27
      %p29 = scmp.ne.s32.totalorder %s21, %s24
      %p30 = scmp.eq.s32.totalorder %s11, 0
      %p31 = por %p29, %p30
      %p32 = scmp.ne.s32.totalorder %s21, %s24
      %p33 = scmp.eq.s32.totalorder %s16, 2
      %p34 = por %p32, %p33
      %p35 = scmp.ne.s32.totalorder %s24, %s25
      %p36 = scmp.eq.s32.totalorder %s16, 0
      %p37 = por %p35, %p36
      %p38 = scmp.ne.s32.totalorder %s24, %s25
      %p39 = scmp.eq.s32.totalorder %s17, 2
      %p40 = por %p38, %p39
      %p42 = scmp.ne.s32.totalorder %s25, %s41
      %p43 = scmp.eq.s32.totalorder %s17, 0
      %p44 = por %p42, %p43
      %s46 = sadd.s32 %s45, 1
      %p49 = scmp.eq.s32.totalorder %s11, 2
      %p50 = scmp.ne.s32.totalorder %s45, %s47
      %p51 = scmp.eq.s32.totalorder %s11, 0
      %p52 = por %p50, %p51
      %p53 = scmp.ne.s32.totalorder %s45, %s47
      %p54 = scmp.eq.s32.totalorder %s16, 2
      %p55 = por %p53, %p54
      %p56 = scmp.ne.s32.totalorder %s47, %s48
      %p57 = scmp.eq.s32.totalorder %s16, 0
      %p58 = por %p56, %p57
      %p59 = scmp.ne.s32.totalorder %s47, %s48
      %p60 = scmp.eq.s32.totalorder %s17, 2
      %p61 = por %p59, %p60
      %p63 = scmp.ne.s32.totalorder %s48, %s62
      %p64 = scmp.eq.s32.totalorder %s17, 0
      %p65 = por %p63, %p64
      %p66 = scmp.le.s32.totalorder 1, %s11
      %p67 = scmp.lt.s32.totalorder %s11, 4
      %p68 = pnand %p66, %p67
      %p69 = pneg %p68
      // Predicated region
      $region9: #{tpu_custom_call.1} parent=5 // pred_check
        _
      $region10: #{tpu_custom_call.1} parent=5 // pred_check_branch
        %71 = sbr.rel (%p68) target = $region12
      $region11: #{tpu_custom_call.1} parent=5 // pred_region
        %s72 = ssub.s32 %s11, 1
      $region12: #{tpu_custom_call.1} parent=5 // pred_fallthru
        _
      %p73 = scmp.lt.s32.totalorder %s11, 3
      // Predicated region
      $region13: #{tpu_custom_call.1} parent=5 // pred_check
        %p74 = pneg %p73
      $region14: #{tpu_custom_call.1} parent=5 // pred_check_branch
        %76 = sbr.rel (%p74) target = $region16
      $region15: #{tpu_custom_call.1} parent=5 // pred_region
        // Predicated region
        $region17: #{tpu_custom_call.1} parent=15 // pred_check
          %p77 = pneg %p31
        $region18: #{tpu_custom_call.1} parent=15 // pred_check_branch
          %79 = sbr.rel (%p77) target = $region20
        $region19: #{tpu_custom_call.1} parent=15 // pred_region
          %s80 = sand.u32 %s21, 1
          %s81 = scalar_lea.sflag [#allocation4], %s80
          %s82 = sand.u32 %s21, 1
          %s83 = smul.addr %s82, 8
          %s84 = scalar_lea.vmem [#allocation3], %s83
          %s86 = ssub.s32 128, 128
          %87 = vsyncadd %s81, %s86
          %s88 = smul.addr %s11, 128
          %s89 = scalar_lea.hbm %s0, %s88
          %s91 = sshll.u32 %s84, 4
          %s92 = int_to_ptr.vmem [resolvable:$true] %s91
          %94 = dma.hbm_to_vmem [thread:$0]  %s89, 128, %s92, %s81
        $region20: #{tpu_custom_call.1} parent=15 // pred_fallthru
          _
      $region16: #{tpu_custom_call.1} parent=5 // pred_fallthru
        _
      %p95 = scmp.le.s32.totalorder 1, %s11
      %p96 = scmp.lt.s32.totalorder %s11, 4
      %p97 = pnand %p95, %p96
      %p98 = pneg %p97
      // Predicated region
      $region21: #{tpu_custom_call.1} parent=5 // pred_check
        _
      $region22: #{tpu_custom_call.1} parent=5 // pred_check_branch
        %100 = sbr.rel (%p97) target = $region24
      $region23: #{tpu_custom_call.1} parent=5 // pred_region
        %s101 = ssub.s32 %s11, 1
        %s102 = sand.u32 %s24, 1
        %s103 = scalar_lea.sflag [#allocation4], %s102
        %s104 = sand.u32 %s24, 1
        %s105 = smul.addr %s104, 8
        %s106 = scalar_lea.vmem [#allocation3], %s105
        // Predicated region
        $region25: #{tpu_custom_call.1} parent=23 // pred_check
          %p107 = pneg %p37
        $region26: #{tpu_custom_call.1} parent=23 // pred_check_branch
          %109 = sbr.rel (%p107) target = $region28
        $region27: #{tpu_custom_call.1} parent=23 // pred_region
          %110 = dma.done %s103, 128
        $region28: #{tpu_custom_call.1} parent=23 // pred_fallthru
          _
        %s111 = sand.u32 %s24, 1
        %s112 = scalar_lea.sflag [#allocation4], %s111
        %s113 = sand.u32 %s24, 1
        %s114 = smul.addr %s113, 8
        %s115 = scalar_lea.vmem [#allocation3], %s114
        %p116 = pneg %p37
        %p117 = pneg %p34
        %p118 = pneg %p58
        %p119 = pneg %p55
        %v120 = vld [vmem:[%s106] sm:$0xff]
        %v121 = vlaneseq
        %v122 = vand.u32 %v121, 127
        %s123 = smul.u32 %s16, 128
        %v124 = vstv %s123
        %v125 = vadd.s32 %v122, %v124
        %vm126 = vcmp.lt.s32.totalorder %v125, 288
        %v127 = vsel %vm126, %v120, 0.0
        %128 = vmatprep.subr.mxu0 0.0
        %129 = vmatpush1.xpose.msra.mxu0 0.0
        %130 = vmatprep.subr.mxu0 0.0
        %131 = vmatpush1.xpose.msra.mxu0 0.0
        %132 = vmatprep.subr.mxu0 0.0
        %133 = vmatpush1.xpose.msra.mxu0 0.0
        %134 = vmatprep.subr.mxu0 0.0
        %135 = vmatpush1.xpose.msra.mxu0 0.0
        %136 = vmatprep.subr.mxu0 0.0
        %137 = vmatpush1.xpose.msra.mxu0 0.0
        %138 = vmatprep.subr.mxu0 0.0
        %139 = vmatpush1.xpose.msra.mxu0 0.0
        %140 = vmatprep.subr.mxu0 0.0
        %141 = vmatpush1.xpose.msra.mxu0 0.0
        %142 = vmatprep.subr.mxu0 0.0
        %143 = vmatpush1.xpose.msra.mxu0 0.0
        %144 = vmatprep.subr.mxu0 0.0
        %145 = vmatpush1.xpose.msra.mxu0 0.0
        %146 = vmatprep.subr.mxu0 0.0
        %147 = vmatpush1.xpose.msra.mxu0 0.0
        %148 = vmatprep.subr.mxu0 0.0
        %149 = vmatpush1.xpose.msra.mxu0 0.0
        %150 = vmatprep.subr.mxu0 0.0
        %151 = vmatpush1.xpose.msra.mxu0 0.0
        %152 = vmatprep.subr.mxu0 0.0
        %153 = vmatpush1.xpose.msra.mxu0 0.0
        %154 = vmatprep.subr.mxu0 0.0
        %155 = vmatpush1.xpose.msra.mxu0 0.0
        %156 = vmatprep.subr.mxu0 0.0
        %157 = vmatpush1.xpose.msra.mxu0 0.0
        %158 = vmatprep.subr.mxu0 0.0
        %159 = vmatpush1.xpose.msra.mxu0 %v127
        %160 = vmatprep.subr.mxu0 0.0
        %161 = vmatpush2.xpose.msra.mxu0 0.0
        %162 = vmatprep.subr.mxu0 0.0
        %163 = vmatpush2.xpose.msra.mxu0 0.0
        %164 = vmatprep.subr.mxu0 0.0
        %165 = vmatpush2.xpose.msra.mxu0 0.0
        %166 = vmatprep.subr.mxu0 0.0
        %167 = vmatpush2.xpose.msra.mxu0 0.0
        %168 = vmatprep.subr.mxu0 0.0
        %169 = vmatpush2.xpose.msra.mxu0 0.0
        %170 = vmatprep.subr.mxu0 0.0
        %171 = vmatpush2.xpose.msra.mxu0 0.0
        %172 = vmatprep.subr.mxu0 0.0
        %173 = vmatpush2.xpose.msra.mxu0 0.0
        %174 = vmatprep.subr.mxu0 0.0
        %175 = vmatpush2.xpose.msra.mxu0 0.0
        %176 = vmatprep.subr.mxu0 0.0
        %177 = vmatpush2.xpose.msra.mxu0 0.0
        %178 = vmatprep.subr.mxu0 0.0
        %179 = vmatpush2.xpose.msra.mxu0 0.0
        %180 = vmatprep.subr.mxu0 0.0
        %181 = vmatpush2.xpose.msra.mxu0 0.0
        %182 = vmatprep.subr.mxu0 0.0
        %183 = vmatpush2.xpose.msra.mxu0 0.0
        %184 = vmatprep.subr.mxu0 0.0
        %185 = vmatpush2.xpose.msra.mxu0 0.0
        %186 = vmatprep.subr.mxu0 0.0
        %187 = vmatpush2.xpose.msra.mxu0 0.0
        %188 = vmatprep.subr.mxu0 0.0
        %189 = vmatpush2.xpose.msra.mxu0 0.0
        %190 = vmatprep.subr.mxu0 0.0
        %191 = vmatpush2.xpose.msra.mxu0 0.0
        %192 = vmatprep.mubr.f32.mxu0 0.0
        %193 = vmatmul.mubr.f32.gmra.mxu0 %v127
        %v194 = vpop.f32.mrf.mxu0
        %v195 = vadd.f32 0.0, %v194
        %v196 = vpop.f32.mrf.mxu0
        %197 = vdwg.mxu0
        %p198 = scmp.eq.s32.totalorder %s16, 0
        // Predicated region
        $region29: #{tpu_custom_call.1} parent=23 // pred_check
          %p199 = pneg %p198
        $region30: #{tpu_custom_call.1} parent=23 // pred_check_branch
          %201 = sbr.rel (%p199) target = $region32
        $region31: #{tpu_custom_call.1} parent=23 // pred_region
          %vm202 = vcmask 64512
          %203 = vst.msk [vmem:[#allocation2] sm:$0xff] %vm202, %v195
        $region32: #{tpu_custom_call.1} parent=23 // pred_fallthru
          _
        %p204 = scmp.ne.s32.totalorder %s16, 0
        // Predicated region
        $region33: #{tpu_custom_call.1} parent=23 // pred_check
          %p205 = pneg %p204
        $region34: #{tpu_custom_call.1} parent=23 // pred_check_branch
          %207 = sbr.rel (%p205) target = $region36
        $region35: #{tpu_custom_call.1} parent=23 // pred_region
          %v208 = vld [vmem:[#allocation2] sm:$0xff]
          %v209 = vadd.f32 %v208, %v195
          %vm210 = vcmask 64512
          %211 = vst.msk [vmem:[#allocation2] sm:$0xff] %vm210, %v209
        $region36: #{tpu_custom_call.1} parent=23 // pred_fallthru
          _
        %p212 = scmp.eq.s32.totalorder %s16, 2
        // Predicated region
        $region37: #{tpu_custom_call.1} parent=23 // pred_check
          %p213 = pneg %p212
        $region38: #{tpu_custom_call.1} parent=23 // pred_check_branch
          %215 = sbr.rel (%p213) target = $region40
        $region39: #{tpu_custom_call.1} parent=23 // pred_region
          %v216 = vld [vmem:[#allocation2] sm:$0xff]
          %v217 = vmul.f32 %v216, 0.00043402778
          %vm218 = vcmask 64512
          %219 = vst.msk [vmem:[#allocation6] sm:$0xff] %vm218, %v217
        $region40: #{tpu_custom_call.1} parent=23 // pred_fallthru
          _
        // Predicated region
        $region41: #{tpu_custom_call.1} parent=23 // pred_check
          %p220 = pneg %p55
        $region42: #{tpu_custom_call.1} parent=23 // pred_check_branch
          %222 = sbr.rel (%p220) target = $region44
        $region43: #{tpu_custom_call.1} parent=23 // pred_region
          %s224 = ssub.s32 128, 128
          %225 = vsyncadd [#allocation5], %s224
          %s227 = sshll.u32 [#allocation6], 4
          %s228 = int_to_ptr.vmem [resolvable:$true] %s227
          %230 = dma.vmem_to_hbm [thread:$0]  %s228, 128, %s1, [#allocation5]
        $region44: #{tpu_custom_call.1} parent=23 // pred_fallthru
          _
        // Predicated region
        $region45: #{tpu_custom_call.1} parent=23 // pred_check
          %p231 = pneg %p55
        $region46: #{tpu_custom_call.1} parent=23 // pred_check_branch
          %233 = sbr.rel (%p231) target = $region48
        $region47: #{tpu_custom_call.1} parent=23 // pred_region
          %234 = dma.done [#allocation5], 128
        $region48: #{tpu_custom_call.1} parent=23 // pred_fallthru
          _
      $region24: #{tpu_custom_call.1} parent=5 // pred_fallthru
        _
      %p235 = scmp.le.s32.totalorder 2, %s11
      // Predicated region
      $region49: #{tpu_custom_call.1} parent=5 // pred_check
        %p236 = pneg %p235
      $region50: #{tpu_custom_call.1} parent=5 // pred_check_branch
        %238 = sbr.rel (%p236) target = $region52
      $region51: #{tpu_custom_call.1} parent=5 // pred_region
        %s239 = ssub.s32 %s11, 2
      $region52: #{tpu_custom_call.1} parent=5 // pred_fallthru
        _
    $region6: #{tpu_custom_call.1} parent=1 // loop_footer
      %s15 = sadd.s32 1, %s11
    $region7: #{tpu_custom_call.1} parent=1 // loop_footer_branch
      %10 = sbr.rel target = $region3
    $region8: #{tpu_custom_call.1} parent=1 // loop_exit
      _
    %240 = vsyncpa [#allocation4], 1
    %s241 = scalar_lea.sflag [#allocation4], 1
    %242 = vsyncpa %s241, 1
    %243 = vsyncpa [#allocation5], 1
    %s244 = scalar_lea.sflag [#allocation5], 1
    %245 = vsyncpa %s244, 1

</llo_original>
